<compile_context>
chip_gen: v6e
topology: v6e:2x2x1
jax: 0.10.0
libtpu: 0.0.40
codegen_flags: <defaults>
</compile_context>

<pallas_src>
import functools

import jax
import jax.numpy as jnp
from jax.experimental import pallas as pl
from jax.experimental.pallas import tpu as pltpu

_LANE = 128
_SUBLANE = 8
_TARGET_BLOCK_BYTES = 2 * 1024 * 1024   # per-input-block DMA size target (~2 MiB)


def _gp_kernel(g_ref, part_ref, *, batch, hw, mask_rows, mask_cols):
    """One (tb, C, thw) batch/spatial tile; channels reduced in-kernel."""
    g = g_ref[...].astype(jnp.float32)              # (tb, C, thw), native dtype in HBM
    ssq = jnp.sum(g * g, axis=1)                    # (tb, thw) channel sum of squares
    norm = jnp.sqrt(ssq + 1e-12)
    term = (norm - 1.0) ** 2
    tb, thw = term.shape

    # NOTE: out-of-bounds rows/cols of a ragged boundary block contain unspecified
    # data (possibly NaN/Inf).  The masking below must stay a select (jnp.where) —
    # never a multiply-by-mask — so that garbage is discarded, not propagated.
    if mask_rows:   # last batch tile may run past B
        rows = pl.program_id(0) * tb + jax.lax.broadcasted_iota(
            jnp.int32, (tb, thw), 0)
        term = jnp.where(rows < batch, term, 0.0)
    if mask_cols:   # last spatial tile may run past H*W
        cols = pl.program_id(1) * thw + jax.lax.broadcasted_iota(
            jnp.int32, (tb, thw), 1)
        term = jnp.where(cols < hw, term, 0.0)

    s = jnp.sum(term)                               # scalar partial for this tile
    # Broadcast the scalar into a fully (8,128)-aligned block: unmasked store, no
    # lane-placement iota/where.  The wrapper reads element [0, 0] of each block.
    part_ref[...] = jnp.broadcast_to(s, part_ref.shape)


def _choose_tiles(batch, channels, hw, itemsize):
    """Pick (tb, thw) for blocks of shape (tb, channels, thw), targeting ~2 MiB."""
    row_bytes = channels * hw * itemsize            # one full batch row (all channels)
    if row_bytes <= _TARGET_BLOCK_BYTES:
        # Whole rows fit: keep the spatial axis un-tiled (full dim is always legal,
        # even if hw % 128 != 0) and pack as many batch rows as the budget allows.
        thw = hw
        tb = max(1, min(batch, _TARGET_BLOCK_BYTES // row_bytes))
    else:
        # One row exceeds the budget: tile the spatial axis in lane multiples.
        tb = 1
        thw = (_TARGET_BLOCK_BYTES // (channels * itemsize)) // _LANE * _LANE
        thw = min(hw, max(_LANE, thw))

    # v7x megacore: the two "parallel" grid axes are what gets sharded across the
    # two TensorCores — make sure there are at least 2 tiles when the data allows.
    nb, nj = pl.cdiv(batch, tb), pl.cdiv(hw, thw)
    if nb * nj < 2:
        if batch >= 2:
            tb = (batch + 1) // 2
        elif thw == hw and hw > _LANE:
            thw = pl.cdiv(pl.cdiv(hw, 2), _LANE) * _LANE
    return tb, thw


def gradient_penalty_from_gradients(gradients, lambda_gp=10.0):
    """Pallas computation of the penalty given d(real_output)/d(real_samples), NCHW."""
    B, C, H, W = gradients.shape
    hw = H * W

    # Free minor-dim collapse (no copy, no extra HBM pass), native dtype.
    g3 = gradients.reshape(B, C, hw)
    itemsize = jnp.dtype(g3.dtype).itemsize

    tb, thw = _choose_tiles(B, C, hw, itemsize)
    nb = pl.cdiv(B, tb)
    nj = pl.cdiv(hw, thw)
    mask_rows = (B % tb) != 0
    mask_cols = (hw % thw) != 0

    kernel = functools.partial(
        _gp_kernel, batch=B, hw=hw, mask_rows=mask_rows, mask_cols=mask_cols)

    in_bytes_native = tb * C * thw * itemsize
    in_bytes_f32 = tb * C * thw * 4
    # Double-buffered native input + headroom for the f32 temporaries of the block.
    vmem_limit = int(min(60 * 1024 * 1024,
                         max(24 * 1024 * 1024,
                             2 * in_bytes_native + 4 * in_bytes_f32)))

    # Deeper buffering only pays off when blocks are small and the grid is long
    # (hides the per-tile epilogue bubble, mainly relevant on v7x).
    if in_bytes_native < 512 * 1024 and nb * nj >= 8:
        in_spec = pl.BlockSpec((tb, C, thw), lambda i, j: (i, 0, j),
                               pipeline_mode=pl.Buffered(3))
    else:
        in_spec = pl.BlockSpec((tb, C, thw), lambda i, j: (i, 0, j))

    partials = pl.pallas_call(
        kernel,
        out_shape=jax.ShapeDtypeStruct((nb * nj, _SUBLANE, _LANE), jnp.float32),
        grid=(nb, nj),
        in_specs=[in_spec],
        out_specs=pl.BlockSpec((1, _SUBLANE, _LANE),
                               lambda i, j: (i * nj + j, 0, 0)),
        compiler_params=pltpu.CompilerParams(
            dimension_semantics=("parallel", "parallel"),
            vmem_limit_bytes=vmem_limit),
    )(g3)

    return (lambda_gp / float(B * hw)) * jnp.sum(partials[:, 0, 0])


def gradient_penalty(disc_fn, real_samples, fake_samples, lambda_gp=10.0):
    """Mirror of GradientPenalty.forward.

    disc_fn: real_samples (B,C,H,W) -> real_output (B,1). Replaces the implicit
    autograd graph carried by `real_output` in the PyTorch version.
    """
    del fake_samples  # unused in the reference forward
    real_output, vjp_fn = jax.vjp(disc_fn, real_samples)
    (gradients,) = vjp_fn(jnp.ones_like(real_output))   # grad_outputs = ones
    return gradient_penalty_from_gradients(gradients, lambda_gp)


if __name__ == "__main__":
    key = jax.random.PRNGKey(0)
    k_real, k_fake, k_w, k_b = jax.random.split(key, 4)

    B, C, H, W = 2, 4, 16, 16
    real_samples = jax.random.normal(k_real, (B, C, H, W), dtype=jnp.float32)
    fake_samples = jax.random.normal(k_fake, (B, C, H, W), dtype=jnp.float32)

    # Deterministic synthetic discriminator: D(x) = sum_chw tanh(x * w) + b -> (B, 1)
    disc_w = jax.random.normal(k_w, (C, H, W), dtype=jnp.float32) * 0.1
    disc_b = jax.random.normal(k_b, (1,), dtype=jnp.float32)

    def disc_fn(x):
        return jnp.sum(jnp.tanh(x * disc_w[None]), axis=(1, 2, 3))[:, None] + disc_b

    penalty = gradient_penalty(disc_fn, real_samples, fake_samples, lambda_gp=10.0)
    penalty = jax.block_until_ready(penalty)

    # Pure-JAX reference (same math as the PyTorch forward) for a silent sanity check.
    real_output, vjp_fn = jax.vjp(disc_fn, real_samples)
    (grads,) = vjp_fn(jnp.ones_like(real_output))
    norm_ref = jnp.sqrt(jnp.sum(grads ** 2, axis=1) + 1e-12)
    penalty_ref = 10.0 * jnp.mean((norm_ref - 1.0) ** 2)
    assert jnp.allclose(penalty, penalty_ref, rtol=1e-5, atol=1e-6), (penalty, penalty_ref)

    print("KERNEL_OK")
</pallas_src>

<mosaic_0001>
module attributes {stable_mosaic.version = 11 : i64} {
  func.func @_gp_kernel(%arg0: i32, %arg1: i32, %arg2: memref<1x4x256xf32, #tpu.memory_space<vmem>>, %arg3: memref<1x8x128xf32, #tpu.memory_space<vmem>>) attributes {dimension_semantics = [#tpu.dimension_semantics<parallel>, #tpu.dimension_semantics<parallel>], iteration_bounds = array<i64: 2, 1>, scalar_prefetch = 0 : i64, scratch_operands = 0 : i64, tpu.core_type = #tpu.core_type<tc>, window_params = [{transform_indices = @transform_0, window_bounds = array<i64: 1, 4, 256>}, {transform_indices = @transform_1, window_bounds = array<i64: 1, 8, 128>}]} {
    %c0 = arith.constant 0 : index
    %c0_0 = arith.constant 0 : index
    %c0_1 = arith.constant 0 : index
    %0 = vector.load %arg2[%c0, %c0_0, %c0_1] : memref<1x4x256xf32, #tpu.memory_space<vmem>>, vector<1x4x256xf32>
    %1 = arith.mulf %0, %0 : vector<1x4x256xf32>
    %cst = arith.constant dense<0.000000e+00> : vector<1x256xf32>
    %2 = vector.multi_reduction <add>, %1, %cst [1] : vector<1x4x256xf32> to vector<1x256xf32>
    %cst_2 = arith.constant 9.99999996E-13 : f32
    %3 = vector.broadcast %cst_2 : f32 to vector<1x256xf32>
    %4 = arith.addf %2, %3 : vector<1x256xf32>
    %5 = math.sqrt %4 : vector<1x256xf32>
    %cst_3 = arith.constant 1.000000e+00 : f32
    %6 = vector.broadcast %cst_3 : f32 to vector<1x256xf32>
    %7 = arith.subf %5, %6 : vector<1x256xf32>
    %8 = arith.mulf %7, %7 : vector<1x256xf32>
    %9 = vector.shape_cast %8 : vector<1x256xf32> to vector<1x1x256xf32>
    %cst_4 = arith.constant dense<0.000000e+00> : vector<1xf32>
    %10 = vector.multi_reduction <add>, %9, %cst_4 [1, 2] : vector<1x1x256xf32> to vector<1xf32>
    %11 = vector.shape_cast %10 : vector<1xf32> to vector<1x1x1xf32>
    %12 = vector.extract %11[0, 0, 0] : f32 from vector<1x1x1xf32>
    %13 = vector.broadcast %12 : f32 to vector<1x8x128xf32>
    %c0_5 = arith.constant 0 : index
    %c0_6 = arith.constant 0 : index
    %c0_7 = arith.constant 0 : index
    %14 = vector.load %arg3[%c0_5, %c0_6, %c0_7] : memref<1x8x128xf32, #tpu.memory_space<vmem>>, vector<1x8x128xf32>
    tpu.vector_store %arg3[%c0_5, %c0_6, %c0_7], %13 {strides = array<i32>} : memref<1x8x128xf32, #tpu.memory_space<vmem>>, vector<1x8x128xf32>,
    return
  }
  func.func @transform_0(%arg0: i32, %arg1: i32) -> (i32, i32, i32) {
    %c0_i32 = arith.constant 0 : i32
    %c0_i32_0 = arith.constant 0 : i32
    return %arg0, %c0_i32, %arg1 : i32, i32, i32
  }
  func.func @transform_1(%arg0: i32, %arg1: i32) -> (i32, i32, i32) {
    %c1_i32 = arith.constant 1 : i32
    %0 = arith.muli %arg0, %c1_i32 : i32
    %1 = arith.addi %0, %arg1 : i32
    %c0_i32 = arith.constant 0 : i32
    %c0_i32_0 = arith.constant 0 : i32
    %c0_i32_1 = arith.constant 0 : i32
    return %1, %c0_i32, %c0_i32_0 : i32, i32, i32
  }
}

</mosaic_0001>

<llo_original>
// kernel: tpu_custom_call.1
$region0: #{tpu_custom_call.1}
  #allocation0 [shape = 'u32[]', space=smem, size = 0x4, offset = 0x4, fixed_abs, tag = 'smem constant byte address 0x4 - core index']
  #allocation1 [shape = 'u32[144,128]{1,0:T(1,128)}', space=vmem, size = 0x12000, scoped, tag = 'internal scratch']
  %s0 = inlined_call_operand.hbm [shape: f32[2,4,256], index: 0, kind: input, shape index: {}]
  %s1 = inlined_call_operand.hbm [shape: f32[2,8,128], index: 1, kind: output, shape index: {}]
  %s2 = sld [smem:[#allocation0]]
  $region41: #{tpu_custom_call.1} parent=0
    _
  %s4 = ssub.s32 1, %s2
  %s5 = scalar_select 0, %s4, %s2
  $region1: #{tpu_custom_call.1} parent=0
    #allocation2 [shape = 'u8[8192]{0}', space=vmem, size = 0x2000, scoped, tag = 'input window, operand 0']
    #allocation3 [shape = 's32[2]{0}', space=sflag, size = 0x8, scoped, tag = 'scoped memory for tpu_custom_call.1']
    #allocation4 [shape = 's32[2]{0}', space=sflag, size = 0x8, scoped, tag = 'scoped memory for tpu_custom_call.1']
    #allocation5 [shape = 'u8[8192]{0}', space=vmem, size = 0x2000, scoped, tag = 'output window, operand 0']
    %6 = vsyncpa [#allocation3], 0
    %s7 = scalar_lea.sflag [#allocation3], 1
    %8 = vsyncpa %s7, 0
    %9 = vsyncpa [#allocation4], 0
    %s10 = scalar_lea.sflag [#allocation4], 1
    %11 = vsyncpa %s10, 0
    loop: start=0, step=1, limit=4
    $region2: #{tpu_custom_call.1} parent=1 // loop_pre_header
      _
    $region3: #{tpu_custom_call.1} parent=1 // loop_header
      %s13 = sphi 0, %s17
      %p14 = scmp.ge.s32.totalorder %s13, 4
      %s20 = sphi 0, %s32
      %s21 = sphi 0, %s28
      %s22 = sphi 0, %s20
      %s23 = sphi 0, %s21
      %s24 = sphi 0, %s22
      %s25 = sphi 0, %s23
      %s37 = sphi 0, %s39
      %s40 = sphi 0, %s37
      %s41 = sphi 0, %s40
      %s57 = sphi 0, %s41
      %s65 = sphi 0, %s67
      %s68 = sphi 0, %s65
      %s69 = sphi 0, %s68
      %s85 = sphi 0, %s69
    $region4: #{tpu_custom_call.1} parent=1 // loop_header_branch
      %16 = sbr.rel (%p14) target = $region8
    $region5: #{tpu_custom_call.1} parent=1 // loop_body
      %s18 = ssub.s32 %s13, 1
      %s19 = ssub.s32 %s13, 2
      %s26 = sadd.s32 1, %s21
      %p27 = scmp.ge.s32.totalorder %s26, 1
      %s28 = scalar_select %p27, 0, %s26
      %s29 = sadd.s32 1, %s20
      %s30 = scalar_select %p27, %s29, %s20
      %p31 = scmp.ge.s32.totalorder %s30, 2
      %s32 = scalar_select %p31, 0, %s30
      %s33 = ssub.s32 %s20, %s32
      %s34 = ssub.s32 %s21, %s28
      %s35 = sor.u32 %s33, %s34
      %p36 = scmp.eq.s32.totalorder %s35, 0
      %s38 = sadd.s32 %s37, 1
      %s39 = scalar_select %p36, %s37, %s38
      %p42 = pneg %p36
      %p43 = scmp.eq.s32.totalorder %s13, 1
      %p44 = por %p42, %p43
      %p45 = scmp.ne.s32.totalorder %s37, %s40
      %p46 = scmp.eq.s32.totalorder %s13, 0
      %p47 = por %p45, %p46
      %p48 = scmp.ne.s32.totalorder %s37, %s40
      %p49 = scmp.eq.s32.totalorder %s18, 1
      %p50 = por %p48, %p49
      %p51 = scmp.ne.s32.totalorder %s40, %s41
      %p52 = scmp.eq.s32.totalorder %s18, 0
      %p53 = por %p51, %p52
      %p54 = scmp.ne.s32.totalorder %s40, %s41
      %p55 = scmp.eq.s32.totalorder %s19, 1
      %p56 = por %p54, %p55
      %p58 = scmp.ne.s32.totalorder %s41, %s57
      %p59 = scmp.eq.s32.totalorder %s19, 0
      %p60 = por %p58, %p59
      %s61 = sadd.s32 %s20, %s21
      %s62 = sadd.s32 %s32, %s28
      %s63 = ssub.s32 %s61, %s62
      %p64 = scmp.eq.s32.totalorder %s63, 0
      %s66 = sadd.s32 %s65, 1
      %s67 = scalar_select %p64, %s65, %s66
      %p70 = pneg %p64
      %p71 = scmp.eq.s32.totalorder %s13, 1
      %p72 = por %p70, %p71
      %p73 = scmp.ne.s32.totalorder %s65, %s68
      %p74 = scmp.eq.s32.totalorder %s13, 0
      %p75 = por %p73, %p74
      %p76 = scmp.ne.s32.totalorder %s65, %s68
      %p77 = scmp.eq.s32.totalorder %s18, 1
      %p78 = por %p76, %p77
      %p79 = scmp.ne.s32.totalorder %s68, %s69
      %p80 = scmp.eq.s32.totalorder %s18, 0
      %p81 = por %p79, %p80
      %p82 = scmp.ne.s32.totalorder %s68, %s69
      %p83 = scmp.eq.s32.totalorder %s19, 1
      %p84 = por %p82, %p83
      %p86 = scmp.ne.s32.totalorder %s69, %s85
      %p87 = scmp.eq.s32.totalorder %s19, 0
      %p88 = por %p86, %p87
      %p89 = scmp.le.s32.totalorder 1, %s13
      %p90 = scmp.lt.s32.totalorder %s13, 3
      %p91 = pnand %p89, %p90
      %p92 = pneg %p91
      // Predicated region
      $region9: #{tpu_custom_call.1} parent=5 // pred_check
        _
      $region10: #{tpu_custom_call.1} parent=5 // pred_check_branch
        %94 = sbr.rel (%p91) target = $region12
      $region11: #{tpu_custom_call.1} parent=5 // pred_region
        %s95 = ssub.s32 %s13, 1
      $region12: #{tpu_custom_call.1} parent=5 // pred_fallthru
        _
      %p96 = scmp.lt.s32.totalorder %s13, 2
      // Predicated region
      $region13: #{tpu_custom_call.1} parent=5 // pred_check
        %p97 = pneg %p96
      $region14: #{tpu_custom_call.1} parent=5 // pred_check_branch
        %99 = sbr.rel (%p97) target = $region16
      $region15: #{tpu_custom_call.1} parent=5 // pred_region
        // Predicated region
        $region17: #{tpu_custom_call.1} parent=15 // pred_check
          %p100 = pneg %p47
        $region18: #{tpu_custom_call.1} parent=15 // pred_check_branch
          %102 = sbr.rel (%p100) target = $region20
        $region19: #{tpu_custom_call.1} parent=15 // pred_region
          %s103 = sand.u32 %s37, 1
          %s104 = scalar_lea.sflag [#allocation3], %s103
          %s105 = sand.u32 %s37, 1
          %s106 = smul.addr %s105, 8
          %s107 = scalar_lea.vmem [#allocation2], %s106
          %s108 = smul.u32 2, %s21
          %s110 = ssub.s32 128, 128
          %111 = vsyncadd %s104, %s110
          %s112 = smul.addr %s20, 2
          %s113 = sadd.s32 %s108, %s112
          %s114 = smul.addr %s113, 64
          %s115 = scalar_lea.hbm %s0, %s114
          %s117 = sshll.u32 %s107, 4
          %s118 = int_to_ptr.vmem [resolvable:$true] %s117
          %120 = dma.hbm_to_vmem [thread:$0]  %s115, 128, %s118, %s104
        $region20: #{tpu_custom_call.1} parent=15 // pred_fallthru
          _
      $region16: #{tpu_custom_call.1} parent=5 // pred_fallthru
        _
      %p121 = scmp.le.s32.totalorder 1, %s13
      %p122 = scmp.lt.s32.totalorder %s13, 3
      %p123 = pnand %p121, %p122
      %p124 = pneg %p123
      // Predicated region
      $region21: #{tpu_custom_call.1} parent=5 // pred_check
        _
      $region22: #{tpu_custom_call.1} parent=5 // pred_check_branch
        %126 = sbr.rel (%p123) target = $region24
      $region23: #{tpu_custom_call.1} parent=5 // pred_region
        %s127 = ssub.s32 %s13, 1
        %s128 = sand.u32 %s40, 1
        %s129 = scalar_lea.sflag [#allocation3], %s128
        %s130 = sand.u32 %s40, 1
        %s131 = smul.addr %s130, 8
        %s132 = scalar_lea.vmem [#allocation2], %s131
        // Predicated region
        $region25: #{tpu_custom_call.1} parent=23 // pred_check
          %p133 = pneg %p53
        $region26: #{tpu_custom_call.1} parent=23 // pred_check_branch
          %135 = sbr.rel (%p133) target = $region28
        $region27: #{tpu_custom_call.1} parent=23 // pred_region
          %136 = dma.done %s129, 128
        $region28: #{tpu_custom_call.1} parent=23 // pred_fallthru
          _
        %s137 = sand.u32 %s40, 1
        %s138 = scalar_lea.sflag [#allocation3], %s137
        %s139 = sand.u32 %s40, 1
        %s140 = smul.addr %s139, 8
        %s141 = scalar_lea.vmem [#allocation2], %s140
        %p142 = pneg %p53
        %p143 = pneg %p50
        %p144 = pneg %p81
        %p145 = pneg %p78
        %s146 = sand.u32 %s68, 1
        %s147 = scalar_lea.sflag [#allocation4], %s146
        %s148 = sand.u32 %s68, 1
        %s149 = smul.addr %s148, 8
        %s150 = scalar_lea.vmem [#allocation5], %s149
        %s151 = smul.u32 2, %s23
        %s152 = sadd.s32 %s22, %s23
        %v153 = vld [vmem:[%s132] sm:$0xff]
        %v154 = vmul.f32 %v153, %v153
        %v156 = vcombine.high %v154, %v154
        %vm158 = vcmask 1043456
        %v159 = vsel %vm158, %v154, 0.0
        %v160 = vrot.slane %v159, 4
        %v161 = vadd.f32 %v159, %v160
        %v162 = vrot.slane %v161, 2
        %v163 = vadd.f32 %v161, %v162
        %v164 = vrot.slane %v163, 1
        %v165 = vadd.f32 %v163, %v164
        %v166 = vsel %vm158, %v156, 0.0
        %v167 = vrot.slane %v166, 4
        %v168 = vadd.f32 %v166, %v167
        %v169 = vrot.slane %v168, 2
        %v170 = vadd.f32 %v168, %v169
        %v171 = vrot.slane %v170, 1
        %v172 = vadd.f32 %v170, %v171
        %v173 = vadd.f32 %v165, 1e-12
        %v174 = vadd.f32 %v172, 1e-12
        %v175 = vrsqrt.pop %v173
        %v176 = vmul.f32 %v173, %v175
        %vm177 = vcmp.eq.f32.partialorder %v173, inf
        %v178 = vsel %vm177, %v173, %v176
        %vm179 = vcmp.eq.f32.partialorder %v173, 0.0
        %v180 = vand.u32 %v173, 2147483648
        %v181 = vsel %vm179, %v180, %v178
        %v182 = vrsqrt.pop %v174
        %v183 = vmul.f32 %v174, %v182
        %vm184 = vcmp.eq.f32.partialorder %v174, inf
        %v185 = vsel %vm184, %v174, %v183
        %vm186 = vcmp.eq.f32.partialorder %v174, 0.0
        %v187 = vand.u32 %v174, 2147483648
        %v188 = vsel %vm186, %v187, %v185
        %v189 = vsub.f32 %v181, 1.0
        %v190 = vsub.f32 %v188, 1.0
        %v191 = vmul.f32 %v189, %v189
        %v192 = vmul.f32 %v190, %v190
        %vm193 = vcmask 1040384
        %v194 = vsel %vm193, %v191, 0.0
        %v195 = vsel %vm193, %v192, 0.0
        %v196 = vadd.f32 %v194, %v195
        %197 = vadd.xlane.f32.xlu0 %v196
        %v198 = vpop.xlane.xlu0 %197
        %v199 = vrot.slane %v198, 4
        %v200 = vadd.f32 %v198, %v199
        %v201 = vrot.slane %v200, 2
        %v202 = vadd.f32 %v200, %v201
        %v203 = vrot.slane %v202, 1
        %v204 = vadd.f32 %v202, %v203
        %s205 = vtos %v204
        %v206 = vstv %s205
        %207 = vst [vmem:[%s150] sm:$0xff] %v206
        %s208 = sand.u32 %s68, 1
        %s209 = scalar_lea.sflag [#allocation4], %s208
        %s210 = sand.u32 %s68, 1
        %s211 = smul.addr %s210, 8
        %s212 = scalar_lea.vmem [#allocation5], %s211
        // Predicated region
        $region29: #{tpu_custom_call.1} parent=23 // pred_check
          %p213 = pneg %p78
        $region30: #{tpu_custom_call.1} parent=23 // pred_check_branch
          %215 = sbr.rel (%p213) target = $region32
        $region31: #{tpu_custom_call.1} parent=23 // pred_region
          %s216 = sadd.s32 %s22, %s23
          %s218 = ssub.s32 128, 128
          %219 = vsyncadd %s209, %s218
          %s220 = smul.addr %s216, 128
          %s221 = scalar_lea.hbm %s1, %s220
          %s223 = sshll.u32 %s212, 4
          %s224 = int_to_ptr.vmem [resolvable:$true] %s223
          %226 = dma.vmem_to_hbm [thread:$0]  %s224, 128, %s221, %s209
        $region32: #{tpu_custom_call.1} parent=23 // pred_fallthru
          _
      $region24: #{tpu_custom_call.1} parent=5 // pred_fallthru
        _
      %p227 = scmp.le.s32.totalorder 2, %s13
      // Predicated region
      $region33: #{tpu_custom_call.1} parent=5 // pred_check
        %p228 = pneg %p227
      $region34: #{tpu_custom_call.1} parent=5 // pred_check_branch
        %230 = sbr.rel (%p228) target = $region36
      $region35: #{tpu_custom_call.1} parent=5 // pred_region
        %s231 = ssub.s32 %s13, 2
        // Predicated region
        $region37: #{tpu_custom_call.1} parent=35 // pred_check
          %p232 = pneg %p84
        $region38: #{tpu_custom_call.1} parent=35 // pred_check_branch
          %234 = sbr.rel (%p232) target = $region40
        $region39: #{tpu_custom_call.1} parent=35 // pred_region
          %s235 = sand.u32 %s69, 1
          %s236 = scalar_lea.sflag [#allocation4], %s235
          %s237 = sand.u32 %s69, 1
          %s238 = smul.addr %s237, 8
          %s239 = scalar_lea.vmem [#allocation5], %s238
          %240 = dma.done %s236, 128
        $region40: #{tpu_custom_call.1} parent=35 // pred_fallthru
          _
      $region36: #{tpu_custom_call.1} parent=5 // pred_fallthru
        _
    $region6: #{tpu_custom_call.1} parent=1 // loop_footer
      %s17 = sadd.s32 1, %s13
    $region7: #{tpu_custom_call.1} parent=1 // loop_footer_branch
      %12 = sbr.rel target = $region3
    $region8: #{tpu_custom_call.1} parent=1 // loop_exit
      _
    %241 = vsyncpa [#allocation3], 1
    %s242 = scalar_lea.sflag [#allocation3], 1
    %243 = vsyncpa %s242, 1
    %244 = vsyncpa [#allocation4], 1
    %s245 = scalar_lea.sflag [#allocation4], 1
    %246 = vsyncpa %s245, 1

</llo_original>
